<compile_context>
chip_gen: v5e
topology: v5e:2x2
jax: 0.10.0
libtpu: 0.0.40
codegen_flags: <defaults>
</compile_context>

<pallas_src>
import jax
import jax.numpy as jnp
from jax.experimental import pallas as pl
from jax.experimental.pallas import tpu as pltpu

_LANE = 128


def _round_up(n, m):
    return ((n + m - 1) // m) * m


def _autoencoder_kernel(x_ref, w1_ref, b1_ref, w2_ref, b2_ref, o_ref):
    # Encoder: Linear(input -> hidden_pad) + ReLU. Weights pre-transposed to
    # [in, out_pad] -> plain MXU matmul with f32 accumulation.
    h = jnp.dot(x_ref[...], w1_ref[...], preferred_element_type=jnp.float32)
    h = jnp.maximum(h + b1_ref[...], 0.0)
    # Decoder: Linear(hidden_pad -> input) + ReLU.  Output written at the true
    # feature width (no lane padding of the output).
    y = jnp.dot(h, w2_ref[...], preferred_element_type=jnp.float32)
    y = jnp.maximum(y + b2_ref[...], 0.0)
    o_ref[...] = y.astype(o_ref.dtype)


def prepare_params(w1, b1, w2, b2):
    """One-time parameter preparation (at init, NOT per forward call).

    w1 : [hidden, input]   (PyTorch nn.Linear convention [out, in])
    b1 : [hidden]
    w2 : [input, hidden]
    b2 : [input]

    Returns weights transposed to [in, out]; the hidden dim is zero-padded to
    a multiple of 128 (exact: padded units contribute nothing). The output
    feature dim is NOT padded, so the kernel writes exactly input_size lanes.
    """
    hidden_size, input_size = w1.shape
    h_pad = _round_up(hidden_size, _LANE)

    w1t = jnp.zeros((input_size, h_pad), w1.dtype).at[:, :hidden_size].set(
        jnp.asarray(w1).T)
    b1p = jnp.zeros((1, h_pad), b1.dtype).at[0, :hidden_size].set(jnp.asarray(b1))
    w2t = jnp.zeros((h_pad, input_size), w2.dtype).at[:hidden_size, :].set(
        jnp.asarray(w2).T)
    b2p = jnp.asarray(b2).reshape(1, input_size)
    return w1t, b1p, w2t, b2p


def _vmem_cap_bytes():
    """Generation-aware VMEM cap (~75% of reported capacity)."""
    try:
        cap = int(pltpu.get_tpu_info().vmem_capacity_bytes)
        return max(32 << 20, int(0.75 * cap))
    except Exception:
        return 48 << 20  # safe on all generations (v7x has 64 MiB physical)


def _pallas_forward(x2, w1t, b1p, w2t, b2p, *, tile_b, vmem_limit,
                    single_buffer_params):
    B, input_size = x2.shape
    h_pad = w1t.shape[1]
    pkw = dict(pipeline_mode=pl.Buffered(1)) if single_buffer_params else {}

    return pl.pallas_call(
        _autoencoder_kernel,
        out_shape=jax.ShapeDtypeStruct((B, input_size), x2.dtype),
        grid=(pl.cdiv(B, tile_b),),
        in_specs=[
            pl.BlockSpec((tile_b, input_size), lambda i: (i, 0)),        # x: batch-tiled
            pl.BlockSpec((input_size, h_pad), lambda i: (0, 0), **pkw),  # W1^T resident
            pl.BlockSpec((1, h_pad), lambda i: (0, 0), **pkw),           # b1 resident
            pl.BlockSpec((h_pad, input_size), lambda i: (0, 0), **pkw),  # W2^T resident
            pl.BlockSpec((1, input_size), lambda i: (0, 0), **pkw),      # b2 resident
        ],
        out_specs=pl.BlockSpec((tile_b, input_size), lambda i: (i, 0)),
        compiler_params=pltpu.CompilerParams(
            dimension_semantics=("parallel",),
            vmem_limit_bytes=vmem_limit,
        ),
    )(x2, w1t, b1p, w2t, b2p)


def vanilla_autoencoder(x, params, *, tile_b=512):
    """Fused forward pass.  `params = prepare_params(w1, b1, w2, b2)`.

    x : [..., input_size]  ->  [..., input_size]
    """
    w1t, b1p, w2t, b2p = params
    input_size, h_pad = w1t.shape

    lead_shape = x.shape[:-1]
    x2 = x.reshape(-1, input_size)          # free view; Linear acts on last dim
    B = x2.shape[0]

    # tile_b: multiple of 8, no larger than the batch (rounded to sublanes),
    # and capped so the parallel batch grid has >= 2 steps (v7x megacore).
    tile_b = _round_up(max(8, min(tile_b, B)), 8)
    if B > 8:
        tile_b = min(tile_b, _round_up(pl.cdiv(B, 2), 8))

    # VMEM budget: resident params (assume 2 buffers, conservative) +
    # double-buffered x/out tiles + the hidden intermediate.
    itemsize = jnp.dtype(x.dtype).itemsize
    param_bytes = sum(int(a.size) * jnp.dtype(a.dtype).itemsize
                      for a in (w1t, b1p, w2t, b2p))
    cap = _vmem_cap_bytes()

    def _budget(tb):
        return (2 * param_bytes
                + 2 * 2 * tb * input_size * itemsize   # x + out, double-buffered
                + tb * h_pad * 4)                       # f32 hidden activations

    while _budget(tile_b) > cap and tile_b > 8:
        tile_b = max(8, _round_up(tile_b // 2, 8))
    # TODO(synk): if the resident f32 weights alone exceed the VMEM cap (very
    # large layers, esp. on v7x's 64 MiB), fall back to a weight-tiled grid
    # (tile hidden/output dims with a VMEM accumulator) instead of residency.

    vmem_limit = int(min(cap, max(2 * _budget(tile_b), 4 << 20)))

    try:
        out = _pallas_forward(x2, w1t, b1p, w2t, b2p, tile_b=tile_b,
                              vmem_limit=vmem_limit, single_buffer_params=True)
    except Exception:
        # pl.Buffered(1) unsupported by this build -> default double-buffered
        # params (slightly more VMEM, identical math).
        out = _pallas_forward(x2, w1t, b1p, w2t, b2p, tile_b=tile_b,
                              vmem_limit=vmem_limit, single_buffer_params=False)

    return out.reshape(*lead_shape, input_size)


def _reference(x, w1, b1, w2, b2):
    h = jnp.maximum(x @ w1.T + b1, 0.0)
    return jnp.maximum(h @ w2.T + b2, 0.0)


if __name__ == "__main__":
    key = jax.random.PRNGKey(0)
    # B=18 is deliberately not a multiple of the batch tile -> exercises the
    # masked last block (no jnp.pad / slicing anywhere).
    B, input_size, hidden_size = 18, 64, 32

    k_x, k_w1, k_b1, k_w2, k_b2 = jax.random.split(key, 5)

    x = jax.random.normal(k_x, (B, input_size), dtype=jnp.float32)

    # Deterministic init mimicking nn.Linear: U(-1/sqrt(fan_in), 1/sqrt(fan_in))
    lim1 = 1.0 / jnp.sqrt(jnp.float32(input_size))
    lim2 = 1.0 / jnp.sqrt(jnp.float32(hidden_size))
    w1 = jax.random.uniform(k_w1, (hidden_size, input_size), jnp.float32, -lim1, lim1)
    b1 = jax.random.uniform(k_b1, (hidden_size,), jnp.float32, -lim1, lim1)
    w2 = jax.random.uniform(k_w2, (input_size, hidden_size), jnp.float32, -lim2, lim2)
    b2 = jax.random.uniform(k_b2, (input_size,), jnp.float32, -lim2, lim2)

    # One-time parameter prep (transpose + lane-dense hidden padding).
    params = prepare_params(w1, b1, w2, b2)

    out = jax.block_until_ready(vanilla_autoencoder(x, params))

    ref = _reference(x, w1, b1, w2, b2)
    assert out.shape == (B, input_size)
    assert jnp.allclose(out, ref, atol=1e-5, rtol=1e-5), "mismatch vs reference"

    print("KERNEL_OK")
</pallas_src>

<mosaic_0001>
module attributes {stable_mosaic.version = 11 : i64} {
  func.func @_autoencoder_kernel(%arg0: i32, %arg1: memref<16x64xf32, #tpu.memory_space<vmem>>, %arg2: memref<64x128xf32, #tpu.memory_space<vmem>>, %arg3: memref<1x128xf32, #tpu.memory_space<vmem>>, %arg4: memref<128x64xf32, #tpu.memory_space<vmem>>, %arg5: memref<1x64xf32, #tpu.memory_space<vmem>>, %arg6: memref<16x64xf32, #tpu.memory_space<vmem>>) attributes {dimension_semantics = [#tpu.dimension_semantics<parallel>], iteration_bounds = array<i64: 2>, scalar_prefetch = 0 : i64, scratch_operands = 0 : i64, tpu.core_type = #tpu.core_type<tc>, window_params = [{transform_indices = @transform_0, window_bounds = array<i64: 16, 64>}, {pipeline_mode = #tpu.pipeline_mode<synchronous>, transform_indices = @transform_1, window_bounds = array<i64: 64, 128>}, {pipeline_mode = #tpu.pipeline_mode<synchronous>, transform_indices = @transform_2, window_bounds = array<i64: 1, 128>}, {pipeline_mode = #tpu.pipeline_mode<synchronous>, transform_indices = @transform_3, window_bounds = array<i64: 128, 64>}, {pipeline_mode = #tpu.pipeline_mode<synchronous>, transform_indices = @transform_4, window_bounds = array<i64: 1, 64>}, {transform_indices = @transform_5, window_bounds = array<i64: 16, 64>}]} {
    %c0 = arith.constant 0 : index
    %c0_0 = arith.constant 0 : index
    %0 = vector.load %arg1[%c0, %c0_0] : memref<16x64xf32, #tpu.memory_space<vmem>>, vector<16x64xf32>
    %c0_1 = arith.constant 0 : index
    %c0_2 = arith.constant 0 : index
    %1 = vector.load %arg2[%c0_1, %c0_2] : memref<64x128xf32, #tpu.memory_space<vmem>>, vector<64x128xf32>
    %cst = arith.constant dense<0.000000e+00> : vector<16x128xf32>
    %2 = tpu.matmul %0, %1, %cst {dimension_numbers = #tpu.dot_dimension_numbers<[1], [0], [0], [1], [0, 0, 1, 1], [], []>} : vector<16x64xf32>, vector<64x128xf32>, vector<16x128xf32> -> vector<16x128xf32>
    %c0_3 = arith.constant 0 : index
    %c0_4 = arith.constant 0 : index
    %3 = vector.load %arg3[%c0_3, %c0_4] : memref<1x128xf32, #tpu.memory_space<vmem>>, vector<1x128xf32>
    %4 = vector.broadcast %3 : vector<1x128xf32> to vector<16x128xf32>
    %5 = arith.addf %2, %4 : vector<16x128xf32>
    %cst_5 = arith.constant 0.000000e+00 : f32
    %6 = vector.broadcast %cst_5 : f32 to vector<16x128xf32>
    %7 = arith.maximumf %5, %6 : vector<16x128xf32>
    %c0_6 = arith.constant 0 : index
    %c0_7 = arith.constant 0 : index
    %8 = vector.load %arg4[%c0_6, %c0_7] : memref<128x64xf32, #tpu.memory_space<vmem>>, vector<128x64xf32>
    %cst_8 = arith.constant dense<0.000000e+00> : vector<16x64xf32>
    %9 = tpu.matmul %7, %8, %cst_8 {dimension_numbers = #tpu.dot_dimension_numbers<[1], [0], [0], [1], [0, 0, 1, 1], [], []>} : vector<16x128xf32>, vector<128x64xf32>, vector<16x64xf32> -> vector<16x64xf32>
    %c0_9 = arith.constant 0 : index
    %c0_10 = arith.constant 0 : index
    %10 = vector.load %arg5[%c0_9, %c0_10] : memref<1x64xf32, #tpu.memory_space<vmem>>, vector<1x64xf32>
    %11 = vector.broadcast %10 : vector<1x64xf32> to vector<16x64xf32>
    %12 = arith.addf %9, %11 : vector<16x64xf32>
    %cst_11 = arith.constant 0.000000e+00 : f32
    %13 = vector.broadcast %cst_11 : f32 to vector<16x64xf32>
    %14 = arith.maximumf %12, %13 : vector<16x64xf32>
    %c0_12 = arith.constant 0 : index
    %c0_13 = arith.constant 0 : index
    %15 = vector.load %arg6[%c0_12, %c0_13] : memref<16x64xf32, #tpu.memory_space<vmem>>, vector<16x64xf32>
    tpu.vector_store %arg6[%c0_12, %c0_13], %14 {strides = array<i32>} : memref<16x64xf32, #tpu.memory_space<vmem>>, vector<16x64xf32>,
    return
  }
  func.func @transform_0(%arg0: i32) -> (i32, i32) {
    %c0_i32 = arith.constant 0 : i32
    %c0_i32_0 = arith.constant 0 : i32
    return %arg0, %c0_i32 : i32, i32
  }
  func.func @transform_1(%arg0: i32) -> (i32, i32) {
    %c0_i32 = arith.constant 0 : i32
    %c0_i32_0 = arith.constant 0 : i32
    %c0_i32_1 = arith.constant 0 : i32
    return %c0_i32, %c0_i32_0 : i32, i32
  }
  func.func @transform_2(%arg0: i32) -> (i32, i32) {
    %c0_i32 = arith.constant 0 : i32
    %c0_i32_0 = arith.constant 0 : i32
    %c0_i32_1 = arith.constant 0 : i32
    return %c0_i32, %c0_i32_0 : i32, i32
  }
  func.func @transform_3(%arg0: i32) -> (i32, i32) {
    %c0_i32 = arith.constant 0 : i32
    %c0_i32_0 = arith.constant 0 : i32
    %c0_i32_1 = arith.constant 0 : i32
    return %c0_i32, %c0_i32_0 : i32, i32
  }
  func.func @transform_4(%arg0: i32) -> (i32, i32) {
    %c0_i32 = arith.constant 0 : i32
    %c0_i32_0 = arith.constant 0 : i32
    %c0_i32_1 = arith.constant 0 : i32
    return %c0_i32, %c0_i32_0 : i32, i32
  }
  func.func @transform_5(%arg0: i32) -> (i32, i32) {
    %c0_i32 = arith.constant 0 : i32
    %c0_i32_0 = arith.constant 0 : i32
    return %arg0, %c0_i32 : i32, i32
  }
}

module attributes {stable_mosaic.version = 11 : i64} {
  func.func @_autoencoder_kernel(%arg0: i32, %arg1: memref<16x64xf32, #tpu.memory_space<vmem>>, %arg2: memref<64x128xf32, #tpu.memory_space<vmem>>, %arg3: memref<1x128xf32, #tpu.memory_space<vmem>>, %arg4: memref<128x64xf32, #tpu.memory_space<vmem>>, %arg5: memref<1x64xf32, #tpu.memory_space<vmem>>, %arg6: memref<16x64xf32, #tpu.memory_space<vmem>>) attributes {dimension_semantics = [#tpu.dimension_semantics<parallel>], iteration_bounds = array<i64: 2>, scalar_prefetch = 0 : i64, scratch_operands = 0 : i64, tpu.core_type = #tpu.core_type<tc>, window_params = [{transform_indices = @transform_0, window_bounds = array<i64: 16, 64>}, {pipeline_mode = #tpu.pipeline_mode<synchronous>, transform_indices = @transform_1, window_bounds = array<i64: 64, 128>}, {pipeline_mode = #tpu.pipeline_mode<synchronous>, transform_indices = @transform_2, window_bounds = array<i64: 1, 128>}, {pipeline_mode = #tpu.pipeline_mode<synchronous>, transform_indices = @transform_3, window_bounds = array<i64: 128, 64>}, {pipeline_mode = #tpu.pipeline_mode<synchronous>, transform_indices = @transform_4, window_bounds = array<i64: 1, 64>}, {transform_indices = @transform_5, window_bounds = array<i64: 16, 64>}]} {
    %c0 = arith.constant 0 : index
    %c0_0 = arith.constant 0 : index
    %0 = vector.load %arg1[%c0, %c0_0] : memref<16x64xf32, #tpu.memory_space<vmem>>, vector<16x64xf32>
    %c0_1 = arith.constant 0 : index
    %c0_2 = arith.constant 0 : index
    %1 = vector.load %arg2[%c0_1, %c0_2] : memref<64x128xf32, #tpu.memory_space<vmem>>, vector<64x128xf32>
    %cst = arith.constant dense<0.000000e+00> : vector<16x128xf32>
    %2 = tpu.matmul %0, %1, %cst {dimension_numbers = #tpu.dot_dimension_numbers<[1], [0], [0], [1], [0, 0, 1, 1], [], []>} : vector<16x64xf32>, vector<64x128xf32>, vector<16x128xf32> -> vector<16x128xf32>
    %c0_3 = arith.constant 0 : index
    %c0_4 = arith.constant 0 : index
    %3 = vector.load %arg3[%c0_3, %c0_4] : memref<1x128xf32, #tpu.memory_space<vmem>>, vector<1x128xf32>
    %4 = vector.broadcast %3 : vector<1x128xf32> to vector<16x128xf32>
    %5 = arith.addf %2, %4 : vector<16x128xf32>
    %cst_5 = arith.constant 0.000000e+00 : f32
    %6 = vector.broadcast %cst_5 : f32 to vector<16x128xf32>
    %7 = arith.maximumf %5, %6 : vector<16x128xf32>
    %c0_6 = arith.constant 0 : index
    %c0_7 = arith.constant 0 : index
    %8 = vector.load %arg4[%c0_6, %c0_7] : memref<128x64xf32, #tpu.memory_space<vmem>>, vector<128x64xf32>
    %cst_8 = arith.constant dense<0.000000e+00> : vector<16x64xf32>
    %9 = tpu.matmul %7, %8, %cst_8 {dimension_numbers = #tpu.dot_dimension_numbers<[1], [0], [0], [1], [0, 0, 1, 1], [], []>} : vector<16x128xf32>, vector<128x64xf32>, vector<16x64xf32> -> vector<16x64xf32>
    %c0_9 = arith.constant 0 : index
    %c0_10 = arith.constant 0 : index
    %10 = vector.load %arg5[%c0_9, %c0_10] : memref<1x64xf32, #tpu.memory_space<vmem>>, vector<1x64xf32>
    %11 = vector.broadcast %10 : vector<1x64xf32> to vector<16x64xf32>
    %12 = arith.addf %9, %11 : vector<16x64xf32>
    %cst_11 = arith.constant 0.000000e+00 : f32
    %13 = vector.broadcast %cst_11 : f32 to vector<16x64xf32>
    %14 = arith.maximumf %12, %13 : vector<16x64xf32>
    %c0_12 = arith.constant 0 : index
    %c0_13 = arith.constant 0 : index
    %15 = vector.load %arg6[%c0_12, %c0_13] : memref<16x64xf32, #tpu.memory_space<vmem>>, vector<16x64xf32>
    tpu.vector_store %arg6[%c0_12, %c0_13], %14 {strides = array<i32>} : memref<16x64xf32, #tpu.memory_space<vmem>>, vector<16x64xf32>,
    return
  }
  func.func @transform_0(%arg0: i32) -> (i32, i32) {
    %c0_i32 = arith.constant 0 : i32
    %c0_i32_0 = arith.constant 0 : i32
    return %arg0, %c0_i32 : i32, i32
  }
  func.func @transform_1(%arg0: i32) -> (i32, i32) {
    %c0_i32 = arith.constant 0 : i32
    %c0_i32_0 = arith.constant 0 : i32
    %c0_i32_1 = arith.constant 0 : i32
    return %c0_i32, %c0_i32_0 : i32, i32
  }
  func.func @transform_2(%arg0: i32) -> (i32, i32) {
    %c0_i32 = arith.constant 0 : i32
    %c0_i32_0 = arith.constant 0 : i32
    %c0_i32_1 = arith.constant 0 : i32
    return %c0_i32, %c0_i32_0 : i32, i32
  }
  func.func @transform_3(%arg0: i32) -> (i32, i32) {
    %c0_i32 = arith.constant 0 : i32
    %c0_i32_0 = arith.constant 0 : i32
    %c0_i32_1 = arith.constant 0 : i32
    return %c0_i32, %c0_i32_0 : i32, i32
  }
  func.func @transform_4(%arg0: i32) -> (i32, i32) {
    %c0_i32 = arith.constant 0 : i32
    %c0_i32_0 = arith.constant 0 : i32
    %c0_i32_1 = arith.constant 0 : i32
    return %c0_i32, %c0_i32_0 : i32, i32
  }
  func.func @transform_5(%arg0: i32) -> (i32, i32) {
    %c0_i32 = arith.constant 0 : i32
    %c0_i32_0 = arith.constant 0 : i32
    return %arg0, %c0_i32 : i32, i32
  }
}

</mosaic_0001>

<llo_original>
// kernel: tpu_custom_call.1
$region0: #{tpu_custom_call.1}
  #allocation0 [shape = 'u32[]', space=smem, size = 0x4, offset = 0x4, fixed_abs, tag = 'smem constant byte address 0x4 - core index']
  #allocation1 [shape = 'u32[72,128]{1,0:T(1,128)}', space=vmem, size = 0x9000, scoped, tag = 'internal scratch']
  %s0 = inlined_call_operand.vmem [shape: f32[18,64], index: 0, kind: input, shape index: {}]
  %s1 = inlined_call_operand.vmem [shape: f32[64,128], index: 1, kind: input, shape index: {}]
  %s2 = inlined_call_operand.vmem [shape: f32[1,128], index: 2, kind: input, shape index: {}]
  %s3 = inlined_call_operand.vmem [shape: f32[128,64], index: 3, kind: input, shape index: {}]
  %s4 = inlined_call_operand.vmem [shape: f32[1,64], index: 4, kind: input, shape index: {}]
  %s5 = inlined_call_operand.hbm [shape: f32[18,64], index: 5, kind: output, shape index: {}]
  %s6 = sld [smem:[#allocation0]]
  $region53: #{tpu_custom_call.1} parent=0
    _
  %s8 = ssub.s32 1, %s6
  %s9 = scalar_select 0, %s8, %s6
  $region1: #{tpu_custom_call.1} parent=0
    #allocation2 [shape = 'u8[16384]{0}', space=vmem, size = 0x4000, scoped, tag = 'output window, operand 0']
    #allocation3 [shape = 's32[2]{0}', space=sflag, size = 0x8, scoped, tag = 'scoped memory for tpu_custom_call.1']
    %10 = vsyncpa [#allocation3], 0
    %s11 = scalar_lea.sflag [#allocation3], 1
    %12 = vsyncpa %s11, 0
    loop: start=0, step=1, limit=4
    $region2: #{tpu_custom_call.1} parent=1 // loop_pre_header
      _
    $region3: #{tpu_custom_call.1} parent=1 // loop_header
      %s14 = sphi 0, %s18
      %p15 = scmp.ge.s32.totalorder %s14, 4
      %s24 = sphi 0, %s26
      %s27 = sphi 0, %s24
      %s28 = sphi 0, %s27
      %s44 = sphi 0, %s28
      %s48 = sphi 0, %s48
      %s50 = sphi 0, %s48
      %s51 = sphi 0, %s50
      %s65 = sphi 0, %s51
      %s69 = sphi 0, %s69
      %s71 = sphi 0, %s69
      %s72 = sphi 0, %s71
      %s86 = sphi 0, %s72
      %s90 = sphi 0, %s90
      %s92 = sphi 0, %s90
      %s93 = sphi 0, %s92
      %s107 = sphi 0, %s93
      %s111 = sphi 0, %s111
      %s113 = sphi 0, %s111
      %s114 = sphi 0, %s113
      %s128 = sphi 0, %s114
      %s134 = sphi 0, %s136
      %s137 = sphi 0, %s134
      %s138 = sphi 0, %s137
      %s154 = sphi 0, %s138
    $region4: #{tpu_custom_call.1} parent=1 // loop_header_branch
      %17 = sbr.rel (%p15) target = $region8
    $region5: #{tpu_custom_call.1} parent=1 // loop_body
      %s19 = ssub.s32 %s14, 1
      %s20 = ssub.s32 %s14, 2
      %s21 = sadd.s32 %s14, 1
      %s22 = ssub.s32 %s14, %s21
      %p23 = scmp.eq.s32.totalorder %s22, 0
      %s25 = sadd.s32 %s24, 1
      %s26 = scalar_select %p23, %s24, %s25
      %p29 = pneg %p23
      %p30 = scmp.eq.s32.totalorder %s14, 1
      %p31 = por %p29, %p30
      %p32 = scmp.ne.s32.totalorder %s24, %s27
      %p33 = scmp.eq.s32.totalorder %s14, 0
      %p34 = por %p32, %p33
      %p35 = scmp.ne.s32.totalorder %s24, %s27
      %p36 = scmp.eq.s32.totalorder %s19, 1
      %p37 = por %p35, %p36
      %p38 = scmp.ne.s32.totalorder %s27, %s28
      %p39 = scmp.eq.s32.totalorder %s19, 0
      %p40 = por %p38, %p39
      %p41 = scmp.ne.s32.totalorder %s27, %s28
      %p42 = scmp.eq.s32.totalorder %s20, 1
      %p43 = por %p41, %p42
      %p45 = scmp.ne.s32.totalorder %s28, %s44
      %p46 = scmp.eq.s32.totalorder %s20, 0
      %p47 = por %p45, %p46
      %s49 = sadd.s32 %s48, 1
      %p52 = scmp.eq.s32.totalorder %s14, 1
      %p53 = scmp.ne.s32.totalorder %s48, %s50
      %p54 = scmp.eq.s32.totalorder %s14, 0
      %p55 = por %p53, %p54
      %p56 = scmp.ne.s32.totalorder %s48, %s50
      %p57 = scmp.eq.s32.totalorder %s19, 1
      %p58 = por %p56, %p57
      %p59 = scmp.ne.s32.totalorder %s50, %s51
      %p60 = scmp.eq.s32.totalorder %s19, 0
      %p61 = por %p59, %p60
      %p62 = scmp.ne.s32.totalorder %s50, %s51
      %p63 = scmp.eq.s32.totalorder %s20, 1
      %p64 = por %p62, %p63
      %p66 = scmp.ne.s32.totalorder %s51, %s65
      %p67 = scmp.eq.s32.totalorder %s20, 0
      %p68 = por %p66, %p67
      %s70 = sadd.s32 %s69, 1
      %p73 = scmp.eq.s32.totalorder %s14, 1
      %p74 = scmp.ne.s32.totalorder %s69, %s71
      %p75 = scmp.eq.s32.totalorder %s14, 0
      %p76 = por %p74, %p75
      %p77 = scmp.ne.s32.totalorder %s69, %s71
      %p78 = scmp.eq.s32.totalorder %s19, 1
      %p79 = por %p77, %p78
      %p80 = scmp.ne.s32.totalorder %s71, %s72
      %p81 = scmp.eq.s32.totalorder %s19, 0
      %p82 = por %p80, %p81
      %p83 = scmp.ne.s32.totalorder %s71, %s72
      %p84 = scmp.eq.s32.totalorder %s20, 1
      %p85 = por %p83, %p84
      %p87 = scmp.ne.s32.totalorder %s72, %s86
      %p88 = scmp.eq.s32.totalorder %s20, 0
      %p89 = por %p87, %p88
      %s91 = sadd.s32 %s90, 1
      %p94 = scmp.eq.s32.totalorder %s14, 1
      %p95 = scmp.ne.s32.totalorder %s90, %s92
      %p96 = scmp.eq.s32.totalorder %s14, 0
      %p97 = por %p95, %p96
      %p98 = scmp.ne.s32.totalorder %s90, %s92
      %p99 = scmp.eq.s32.totalorder %s19, 1
      %p100 = por %p98, %p99
      %p101 = scmp.ne.s32.totalorder %s92, %s93
      %p102 = scmp.eq.s32.totalorder %s19, 0
      %p103 = por %p101, %p102
      %p104 = scmp.ne.s32.totalorder %s92, %s93
      %p105 = scmp.eq.s32.totalorder %s20, 1
      %p106 = por %p104, %p105
      %p108 = scmp.ne.s32.totalorder %s93, %s107
      %p109 = scmp.eq.s32.totalorder %s20, 0
      %p110 = por %p108, %p109
      %s112 = sadd.s32 %s111, 1
      %p115 = scmp.eq.s32.totalorder %s14, 1
      %p116 = scmp.ne.s32.totalorder %s111, %s113
      %p117 = scmp.eq.s32.totalorder %s14, 0
      %p118 = por %p116, %p117
      %p119 = scmp.ne.s32.totalorder %s111, %s113
      %p120 = scmp.eq.s32.totalorder %s19, 1
      %p121 = por %p119, %p120
      %p122 = scmp.ne.s32.totalorder %s113, %s114
      %p123 = scmp.eq.s32.totalorder %s19, 0
      %p124 = por %p122, %p123
      %p125 = scmp.ne.s32.totalorder %s113, %s114
      %p126 = scmp.eq.s32.totalorder %s20, 1
      %p127 = por %p125, %p126
      %p129 = scmp.ne.s32.totalorder %s114, %s128
      %p130 = scmp.eq.s32.totalorder %s20, 0
      %p131 = por %p129, %p130
      %s132 = ssub.s32 %s14, %s21
      %p133 = scmp.eq.s32.totalorder %s132, 0
      %s135 = sadd.s32 %s134, 1
      %s136 = scalar_select %p133, %s134, %s135
      %p139 = pneg %p133
      %p140 = scmp.eq.s32.totalorder %s14, 1
      %p141 = por %p139, %p140
      %p142 = scmp.ne.s32.totalorder %s134, %s137
      %p143 = scmp.eq.s32.totalorder %s14, 0
      %p144 = por %p142, %p143
      %p145 = scmp.ne.s32.totalorder %s134, %s137
      %p146 = scmp.eq.s32.totalorder %s19, 1
      %p147 = por %p145, %p146
      %p148 = scmp.ne.s32.totalorder %s137, %s138
      %p149 = scmp.eq.s32.totalorder %s19, 0
      %p150 = por %p148, %p149
      %p151 = scmp.ne.s32.totalorder %s137, %s138
      %p152 = scmp.eq.s32.totalorder %s20, 1
      %p153 = por %p151, %p152
      %p155 = scmp.ne.s32.totalorder %s138, %s154
      %p156 = scmp.eq.s32.totalorder %s20, 0
      %p157 = por %p155, %p156
      %p158 = scmp.le.s32.totalorder 1, %s14
      %p159 = scmp.lt.s32.totalorder %s14, 3
      %p160 = pnand %p158, %p159
      %p161 = pneg %p160
      // Predicated region
      $region9: #{tpu_custom_call.1} parent=5 // pred_check
        _
      $region10: #{tpu_custom_call.1} parent=5 // pred_check_branch
        %163 = sbr.rel (%p160) target = $region12
      $region11: #{tpu_custom_call.1} parent=5 // pred_region
        %s164 = ssub.s32 %s14, 1
        // Predicated region
        $region13: #{tpu_custom_call.1} parent=11 // pred_check
          %p165 = pneg %p61
        $region14: #{tpu_custom_call.1} parent=11 // pred_check_branch
          %167 = sbr.rel (%p165) target = $region16
        $region15: #{tpu_custom_call.1} parent=11 // pred_region
          _
        $region16: #{tpu_custom_call.1} parent=11 // pred_fallthru
          _
        // Predicated region
        $region17: #{tpu_custom_call.1} parent=11 // pred_check
          %p168 = pneg %p82
        $region18: #{tpu_custom_call.1} parent=11 // pred_check_branch
          %170 = sbr.rel (%p168) target = $region20
        $region19: #{tpu_custom_call.1} parent=11 // pred_region
          _
        $region20: #{tpu_custom_call.1} parent=11 // pred_fallthru
          _
        // Predicated region
        $region21: #{tpu_custom_call.1} parent=11 // pred_check
          %p171 = pneg %p103
        $region22: #{tpu_custom_call.1} parent=11 // pred_check_branch
          %173 = sbr.rel (%p171) target = $region24
        $region23: #{tpu_custom_call.1} parent=11 // pred_region
          _
        $region24: #{tpu_custom_call.1} parent=11 // pred_fallthru
          _
        // Predicated region
        $region25: #{tpu_custom_call.1} parent=11 // pred_check
          %p174 = pneg %p124
        $region26: #{tpu_custom_call.1} parent=11 // pred_check_branch
          %176 = sbr.rel (%p174) target = $region28
        $region27: #{tpu_custom_call.1} parent=11 // pred_region
          _
        $region28: #{tpu_custom_call.1} parent=11 // pred_fallthru
          _
      $region12: #{tpu_custom_call.1} parent=5 // pred_fallthru
        _
      %p177 = scmp.lt.s32.totalorder %s14, 2
      // Predicated region
      $region29: #{tpu_custom_call.1} parent=5 // pred_check
        %p178 = pneg %p177
      $region30: #{tpu_custom_call.1} parent=5 // pred_check_branch
        %180 = sbr.rel (%p178) target = $region32
      $region31: #{tpu_custom_call.1} parent=5 // pred_region
        // Predicated region
        $region33: #{tpu_custom_call.1} parent=31 // pred_check
          %p181 = pneg %p34
        $region34: #{tpu_custom_call.1} parent=31 // pred_check_branch
          %183 = sbr.rel (%p181) target = $region36
        $region35: #{tpu_custom_call.1} parent=31 // pred_region
          %s184 = smul.u32 2, %s14
          %s185 = ssub.s32 3, %s184
          %p186 = scmp.lt.s32.totalorder %s185, 2
          %s187 = scalar_select %p186, %s185, 2
          %s188 = smul.u32 8, %s187
          %p189 = scmp.lt.s32.totalorder %s184, 2
          %s190 = scalar_select %p189, %s184, 2
          %s191 = smul.addr %s190, 8
          %s192 = scalar_lea.vmem %s0, %s191
          %s193 = smul.u32 2, %s14
          %s194 = ssub.s32 3, %s193
          %p195 = scmp.lt.s32.totalorder %s194, 2
          %s196 = scalar_select %p195, %s194, 2
          %s197 = smul.u32 8, %s196
        $region36: #{tpu_custom_call.1} parent=31 // pred_fallthru
          _
      $region32: #{tpu_custom_call.1} parent=5 // pred_fallthru
        _
      %p198 = scmp.le.s32.totalorder 1, %s14
      %p199 = scmp.lt.s32.totalorder %s14, 3
      %p200 = pnand %p198, %p199
      %p201 = pneg %p200
      // Predicated region
      $region37: #{tpu_custom_call.1} parent=5 // pred_check
        _
      $region38: #{tpu_custom_call.1} parent=5 // pred_check_branch
        %203 = sbr.rel (%p200) target = $region40
      $region39: #{tpu_custom_call.1} parent=5 // pred_region
        %s204 = ssub.s32 %s14, 1
        %s205 = smul.u32 2, %s19
        %s206 = ssub.s32 3, %s205
        %p207 = scmp.lt.s32.totalorder %s206, 2
        %s208 = scalar_select %p207, %s206, 2
        %s209 = smul.u32 8, %s208
        %p210 = scmp.lt.s32.totalorder %s205, 2
        %s211 = scalar_select %p210, %s205, 2
        %s212 = smul.addr %s211, 8
        %s213 = scalar_lea.vmem %s0, %s212
        %p214 = pneg %p40
        %p215 = pneg %p37
        %p216 = pneg %p61
        %p217 = pneg %p58
        %p218 = pneg %p82
        %p219 = pneg %p79
        %p220 = pneg %p103
        %p221 = pneg %p100
        %p222 = pneg %p124
        %p223 = pneg %p121
        %p224 = pneg %p150
        %p225 = pneg %p147
        %s226 = sand.u32 %s137, 1
        %s227 = scalar_lea.sflag [#allocation3], %s226
        %s228 = sand.u32 %s137, 1
        %s229 = smul.addr %s228, 16
        %s230 = scalar_lea.vmem [#allocation2], %s229
        %s231 = smul.u32 2, %s19
        %s232 = ssub.s32 3, %s231
        %p233 = scmp.lt.s32.totalorder %s232, 2
        %s234 = scalar_select %p233, %s232, 2
        %s235 = smul.u32 8, %s234
        %p236 = scmp.lt.s32.totalorder %s231, 2
        %s237 = scalar_select %p236, %s231, 2
        %s238 = smul.addr %s237, 8
        %s239 = scalar_lea.vmem %s0, %s238
        %s240 = smul.u32 2, %s19
        %s241 = ssub.s32 3, %s240
        %p242 = scmp.lt.s32.totalorder %s241, 2
        %s243 = scalar_select %p242, %s241, 2
        %s244 = smul.u32 8, %s243
        %s245 = smul.u32 2, %s19
        %s246 = ssub.s32 3, %s245
        %p247 = scmp.lt.s32.totalorder %s246, 2
        %s248 = scalar_select %p247, %s246, 2
        %s249 = smul.u32 8, %s248
        %v250 = vld [vmem:[%s239] sm:$0xff]
        %v251 = vld [vmem:[%s239 + $0x8] sm:$0xff]
        %v252 = vld [vmem:[%s1] sm:$0xff]
        %v253 = vld [vmem:[%s1 + $0x8] sm:$0xff]
        %v254 = vld [vmem:[%s1 + $0x10] sm:$0xff]
        %v255 = vld [vmem:[%s1 + $0x18] sm:$0xff]
        %v256 = vld [vmem:[%s1 + $0x20] sm:$0xff]
        %v257 = vld [vmem:[%s1 + $0x28] sm:$0xff]
        %v258 = vld [vmem:[%s1 + $0x30] sm:$0xff]
        %v259 = vld [vmem:[%s1 + $0x38] sm:$0xff]
        %v260 = vld [vmem:[%s2] sm:$0x1]
        %v262 = vperm.slane %v260, 0
        %vm264 = vcmask 523264
        %v266 = vsel %vm264, %v250, 0
        %v269 = vsel %vm264, %v251, 0
        %271 = vmatpush.msra.mxu0 0.0
        %272 = vmatpush.msra.mxu0 0.0
        %273 = vmatpush.msra.mxu0 0.0
        %274 = vmatpush.msra.mxu0 0.0
        %275 = vmatpush.msra.mxu0 0.0
        %276 = vmatpush.msra.mxu0 0.0
        %277 = vmatpush.msra.mxu0 0.0
        %278 = vmatpush.msra.mxu0 0.0
        %279 = vmatpush.msra.mxu0 %v259
        %280 = vmatpush.msra.mxu0 %v258
        %281 = vmatpush.msra.mxu0 %v257
        %282 = vmatpush.msra.mxu0 %v256
        %283 = vmatpush.msra.mxu0 %v255
        %284 = vmatpush.msra.mxu0 %v254
        %285 = vmatpush.msra.mxu0 %v253
        %286 = vmatpush.msra.mxu0 %v252
        %287 = vmatmul.f32.gmra.mxu0 %v266
        %v288 = vpop.f32.mrf.mxu0
        %v289 = vadd.f32 %v262, %v288
        %290 = vmatmul.f32.gmra.mxu0 %v269
        %v291 = vpop.f32.mrf.mxu0
        %v292 = vadd.f32 %v262, %v291
        %293 = vdwg.mxu0
        %v294 = vmax.f32 %v289, 0.0
        %v295 = vmax.f32 %v292, 0.0
        %v296 = vld [vmem:[%s3] sm:$0xff]
        %v297 = vld [vmem:[%s3 + $0x8] sm:$0xff]
        %v298 = vld [vmem:[%s3 + $0x10] sm:$0xff]
        %v299 = vld [vmem:[%s3 + $0x18] sm:$0xff]
        %v300 = vld [vmem:[%s3 + $0x20] sm:$0xff]
        %v301 = vld [vmem:[%s3 + $0x28] sm:$0xff]
        %v302 = vld [vmem:[%s3 + $0x30] sm:$0xff]
        %v303 = vld [vmem:[%s3 + $0x38] sm:$0xff]
        %v304 = vld [vmem:[%s3 + $0x40] sm:$0xff]
        %v305 = vld [vmem:[%s3 + $0x48] sm:$0xff]
        %v306 = vld [vmem:[%s3 + $0x50] sm:$0xff]
        %v307 = vld [vmem:[%s3 + $0x58] sm:$0xff]
        %v308 = vld [vmem:[%s3 + $0x60] sm:$0xff]
        %v309 = vld [vmem:[%s3 + $0x68] sm:$0xff]
        %v310 = vld [vmem:[%s3 + $0x70] sm:$0xff]
        %v311 = vld [vmem:[%s3 + $0x78] sm:$0xff]
        %v312 = vld [vmem:[%s4] sm:$0x1]
        %v314 = vperm.slane %v312, 0
        %316 = vmatpush.msra.mxu0 %v311
        %317 = vmatpush.msra.mxu0 %v310
        %318 = vmatpush.msra.mxu0 %v309
        %319 = vmatpush.msra.mxu0 %v308
        %320 = vmatpush.msra.mxu0 %v307
        %321 = vmatpush.msra.mxu0 %v306
        %322 = vmatpush.msra.mxu0 %v305
        %323 = vmatpush.msra.mxu0 %v304
        %324 = vmatpush.msra.mxu0 %v303
        %325 = vmatpush.msra.mxu0 %v302
        %326 = vmatpush.msra.mxu0 %v301
        %327 = vmatpush.msra.mxu0 %v300
        %328 = vmatpush.msra.mxu0 %v299
        %329 = vmatpush.msra.mxu0 %v298
        %330 = vmatpush.msra.mxu0 %v297
        %331 = vmatpush.msra.mxu0 %v296
        %332 = vmatmul.f32.gmra.mxu0 %v294
        %v333 = vpop.f32.mrf.mxu0
        %v334 = vadd.f32 %v314, %v333
        %335 = vmatmul.f32.gmra.mxu0 %v295
        %v336 = vpop.f32.mrf.mxu0
        %v337 = vadd.f32 %v314, %v336
        %338 = vdwg.mxu0
        %v339 = vmax.f32 %v334, 0.0
        %v340 = vmax.f32 %v337, 0.0
        %341 = vst.msk [vmem:[%s230] sm:$0xff] %vm264, %v339
        %342 = vst.msk [vmem:[%s230 + $0x8] sm:$0xff] %vm264, %v340
        %s343 = sand.u32 %s137, 1
        %s344 = scalar_lea.sflag [#allocation3], %s343
        %s345 = sand.u32 %s137, 1
        %s346 = smul.addr %s345, 16
        %s347 = scalar_lea.vmem [#allocation2], %s346
        // Predicated region
        $region41: #{tpu_custom_call.1} parent=39 // pred_check
          %p348 = pneg %p147
        $region42: #{tpu_custom_call.1} parent=39 // pred_check_branch
          %350 = sbr.rel (%p348) target = $region44
        $region43: #{tpu_custom_call.1} parent=39 // pred_region
          %s351 = smul.u32 2, %s19
          %s352 = ssub.s32 3, %s351
          %p353 = scmp.lt.s32.totalorder %s352, 2
          %s354 = scalar_select %p353, %s352, 2
          %s355 = smul.u32 8, %s354
          %s356 = ssub.s32 16, %s355
          %s357 = sshll.u32 %s356, 4
          %358 = vsyncadd %s344, %s357
          %p359 = scmp.ne.s32.totalorder 0, %s355
          %s360 = smul.addr %s351, 8
          %s361 = scalar_lea.hbm %s5, %s360
          %s362 = smul.u32 8, %s354
          %s363 = sshll.u32 %s347, 4
          %s364 = int_to_ptr.vmem [resolvable:$true] %s363
          %s365 = sshll.u32 %s361, 4
          %s366 = int_to_ptr.hbm [resolvable:$true] %s365
          %s367 = sshll.u32 %s362, 4
          %371 = dma.vmem_to_hbm [thread:$0]  (%p359), %s364, %s367, %s366, %s344, 128, 128, 8
        $region44: #{tpu_custom_call.1} parent=39 // pred_fallthru
          _
      $region40: #{tpu_custom_call.1} parent=5 // pred_fallthru
        _
      %p372 = scmp.le.s32.totalorder 2, %s14
      // Predicated region
      $region45: #{tpu_custom_call.1} parent=5 // pred_check
        %p373 = pneg %p372
      $region46: #{tpu_custom_call.1} parent=5 // pred_check_branch
        %375 = sbr.rel (%p373) target = $region48
      $region47: #{tpu_custom_call.1} parent=5 // pred_region
        %s376 = ssub.s32 %s14, 2
        // Predicated region
        $region49: #{tpu_custom_call.1} parent=47 // pred_check
          %p377 = pneg %p153
        $region50: #{tpu_custom_call.1} parent=47 // pred_check_branch
          %379 = sbr.rel (%p377) target = $region52
        $region51: #{tpu_custom_call.1} parent=47 // pred_region
          %s380 = sand.u32 %s138, 1
          %s381 = scalar_lea.sflag [#allocation3], %s380
          %s382 = sand.u32 %s138, 1
          %s383 = smul.addr %s382, 16
          %s384 = scalar_lea.vmem [#allocation2], %s383
          %386 = dma.done %s381, 256
        $region52: #{tpu_custom_call.1} parent=47 // pred_fallthru
          _
      $region48: #{tpu_custom_call.1} parent=5 // pred_fallthru
        _
    $region6: #{tpu_custom_call.1} parent=1 // loop_footer
      %s18 = sadd.s32 1, %s14
    $region7: #{tpu_custom_call.1} parent=1 // loop_footer_branch
      %13 = sbr.rel target = $region3
    $region8: #{tpu_custom_call.1} parent=1 // loop_exit
      _
    %387 = vsyncpa [#allocation3], 1
    %s388 = scalar_lea.sflag [#allocation3], 1
    %389 = vsyncpa %s388, 1

// kernel: tpu_custom_call.1
$region0: #{tpu_custom_call.1}
  #allocation0 [shape = 'u32[]', space=smem, size = 0x4, offset = 0x4, fixed_abs, tag = 'smem constant byte address 0x4 - core index']
  #allocation1 [shape = 'u32[72,128]{1,0:T(1,128)}', space=vmem, size = 0x9000, scoped, tag = 'internal scratch']
  %s0 = inlined_call_operand.vmem [shape: f32[18,64], index: 0, kind: input, shape index: {}]
  %s1 = inlined_call_operand.vmem [shape: f32[64,128], index: 1, kind: input, shape index: {}]
  %s2 = inlined_call_operand.vmem [shape: f32[1,128], index: 2, kind: input, shape index: {}]
  %s3 = inlined_call_operand.vmem [shape: f32[128,64], index: 3, kind: input, shape index: {}]
  %s4 = inlined_call_operand.vmem [shape: f32[1,64], index: 4, kind: input, shape index: {}]
  %s5 = inlined_call_operand.hbm [shape: f32[18,64], index: 5, kind: output, shape index: {}]
  %s6 = sld [smem:[#allocation0]]
  $region53: #{tpu_custom_call.1} parent=0
    _
  %s8 = ssub.s32 1, %s6
  %s9 = scalar_select 0, %s8, %s6
  $region1: #{tpu_custom_call.1} parent=0
    #allocation2 [shape = 'u8[16384]{0}', space=vmem, size = 0x4000, scoped, tag = 'output window, operand 0']
    #allocation3 [shape = 's32[2]{0}', space=sflag, size = 0x8, scoped, tag = 'scoped memory for tpu_custom_call.1']
    %10 = vsyncpa [#allocation3], 0
    %s11 = scalar_lea.sflag [#allocation3], 1
    %12 = vsyncpa %s11, 0
    loop: start=0, step=1, limit=4
    $region2: #{tpu_custom_call.1} parent=1 // loop_pre_header
      _
    $region3: #{tpu_custom_call.1} parent=1 // loop_header
      %s14 = sphi 0, %s18
      %p15 = scmp.ge.s32.totalorder %s14, 4
      %s24 = sphi 0, %s26
      %s27 = sphi 0, %s24
      %s28 = sphi 0, %s27
      %s44 = sphi 0, %s28
      %s48 = sphi 0, %s48
      %s50 = sphi 0, %s48
      %s51 = sphi 0, %s50
      %s65 = sphi 0, %s51
      %s69 = sphi 0, %s69
      %s71 = sphi 0, %s69
      %s72 = sphi 0, %s71
      %s86 = sphi 0, %s72
      %s90 = sphi 0, %s90
      %s92 = sphi 0, %s90
      %s93 = sphi 0, %s92
      %s107 = sphi 0, %s93
      %s111 = sphi 0, %s111
      %s113 = sphi 0, %s111
      %s114 = sphi 0, %s113
      %s128 = sphi 0, %s114
      %s134 = sphi 0, %s136
      %s137 = sphi 0, %s134
      %s138 = sphi 0, %s137
      %s154 = sphi 0, %s138
    $region4: #{tpu_custom_call.1} parent=1 // loop_header_branch
      %17 = sbr.rel (%p15) target = $region8
    $region5: #{tpu_custom_call.1} parent=1 // loop_body
      %s19 = ssub.s32 %s14, 1
      %s20 = ssub.s32 %s14, 2
      %s21 = sadd.s32 %s14, 1
      %s22 = ssub.s32 %s14, %s21
      %p23 = scmp.eq.s32.totalorder %s22, 0
      %s25 = sadd.s32 %s24, 1
      %s26 = scalar_select %p23, %s24, %s25
      %p29 = pneg %p23
      %p30 = scmp.eq.s32.totalorder %s14, 1
      %p31 = por %p29, %p30
      %p32 = scmp.ne.s32.totalorder %s24, %s27
      %p33 = scmp.eq.s32.totalorder %s14, 0
      %p34 = por %p32, %p33
      %p35 = scmp.ne.s32.totalorder %s24, %s27
      %p36 = scmp.eq.s32.totalorder %s19, 1
      %p37 = por %p35, %p36
      %p38 = scmp.ne.s32.totalorder %s27, %s28
      %p39 = scmp.eq.s32.totalorder %s19, 0
      %p40 = por %p38, %p39
      %p41 = scmp.ne.s32.totalorder %s27, %s28
      %p42 = scmp.eq.s32.totalorder %s20, 1
      %p43 = por %p41, %p42
      %p45 = scmp.ne.s32.totalorder %s28, %s44
      %p46 = scmp.eq.s32.totalorder %s20, 0
      %p47 = por %p45, %p46
      %s49 = sadd.s32 %s48, 1
      %p52 = scmp.eq.s32.totalorder %s14, 1
      %p53 = scmp.ne.s32.totalorder %s48, %s50
      %p54 = scmp.eq.s32.totalorder %s14, 0
      %p55 = por %p53, %p54
      %p56 = scmp.ne.s32.totalorder %s48, %s50
      %p57 = scmp.eq.s32.totalorder %s19, 1
      %p58 = por %p56, %p57
      %p59 = scmp.ne.s32.totalorder %s50, %s51
      %p60 = scmp.eq.s32.totalorder %s19, 0
      %p61 = por %p59, %p60
      %p62 = scmp.ne.s32.totalorder %s50, %s51
      %p63 = scmp.eq.s32.totalorder %s20, 1
      %p64 = por %p62, %p63
      %p66 = scmp.ne.s32.totalorder %s51, %s65
      %p67 = scmp.eq.s32.totalorder %s20, 0
      %p68 = por %p66, %p67
      %s70 = sadd.s32 %s69, 1
      %p73 = scmp.eq.s32.totalorder %s14, 1
      %p74 = scmp.ne.s32.totalorder %s69, %s71
      %p75 = scmp.eq.s32.totalorder %s14, 0
      %p76 = por %p74, %p75
      %p77 = scmp.ne.s32.totalorder %s69, %s71
      %p78 = scmp.eq.s32.totalorder %s19, 1
      %p79 = por %p77, %p78
      %p80 = scmp.ne.s32.totalorder %s71, %s72
      %p81 = scmp.eq.s32.totalorder %s19, 0
      %p82 = por %p80, %p81
      %p83 = scmp.ne.s32.totalorder %s71, %s72
      %p84 = scmp.eq.s32.totalorder %s20, 1
      %p85 = por %p83, %p84
      %p87 = scmp.ne.s32.totalorder %s72, %s86
      %p88 = scmp.eq.s32.totalorder %s20, 0
      %p89 = por %p87, %p88
      %s91 = sadd.s32 %s90, 1
      %p94 = scmp.eq.s32.totalorder %s14, 1
      %p95 = scmp.ne.s32.totalorder %s90, %s92
      %p96 = scmp.eq.s32.totalorder %s14, 0
      %p97 = por %p95, %p96
      %p98 = scmp.ne.s32.totalorder %s90, %s92
      %p99 = scmp.eq.s32.totalorder %s19, 1
      %p100 = por %p98, %p99
      %p101 = scmp.ne.s32.totalorder %s92, %s93
      %p102 = scmp.eq.s32.totalorder %s19, 0
      %p103 = por %p101, %p102
      %p104 = scmp.ne.s32.totalorder %s92, %s93
      %p105 = scmp.eq.s32.totalorder %s20, 1
      %p106 = por %p104, %p105
      %p108 = scmp.ne.s32.totalorder %s93, %s107
      %p109 = scmp.eq.s32.totalorder %s20, 0
      %p110 = por %p108, %p109
      %s112 = sadd.s32 %s111, 1
      %p115 = scmp.eq.s32.totalorder %s14, 1
      %p116 = scmp.ne.s32.totalorder %s111, %s113
      %p117 = scmp.eq.s32.totalorder %s14, 0
      %p118 = por %p116, %p117
      %p119 = scmp.ne.s32.totalorder %s111, %s113
      %p120 = scmp.eq.s32.totalorder %s19, 1
      %p121 = por %p119, %p120
      %p122 = scmp.ne.s32.totalorder %s113, %s114
      %p123 = scmp.eq.s32.totalorder %s19, 0
      %p124 = por %p122, %p123
      %p125 = scmp.ne.s32.totalorder %s113, %s114
      %p126 = scmp.eq.s32.totalorder %s20, 1
      %p127 = por %p125, %p126
      %p129 = scmp.ne.s32.totalorder %s114, %s128
      %p130 = scmp.eq.s32.totalorder %s20, 0
      %p131 = por %p129, %p130
      %s132 = ssub.s32 %s14, %s21
      %p133 = scmp.eq.s32.totalorder %s132, 0
      %s135 = sadd.s32 %s134, 1
      %s136 = scalar_select %p133, %s134, %s135
      %p139 = pneg %p133
      %p140 = scmp.eq.s32.totalorder %s14, 1
      %p141 = por %p139, %p140
      %p142 = scmp.ne.s32.totalorder %s134, %s137
      %p143 = scmp.eq.s32.totalorder %s14, 0
      %p144 = por %p142, %p143
      %p145 = scmp.ne.s32.totalorder %s134, %s137
      %p146 = scmp.eq.s32.totalorder %s19, 1
      %p147 = por %p145, %p146
      %p148 = scmp.ne.s32.totalorder %s137, %s138
      %p149 = scmp.eq.s32.totalorder %s19, 0
      %p150 = por %p148, %p149
      %p151 = scmp.ne.s32.totalorder %s137, %s138
      %p152 = scmp.eq.s32.totalorder %s20, 1
      %p153 = por %p151, %p152
      %p155 = scmp.ne.s32.totalorder %s138, %s154
      %p156 = scmp.eq.s32.totalorder %s20, 0
      %p157 = por %p155, %p156
      %p158 = scmp.le.s32.totalorder 1, %s14
      %p159 = scmp.lt.s32.totalorder %s14, 3
      %p160 = pnand %p158, %p159
      %p161 = pneg %p160
      // Predicated region
      $region9: #{tpu_custom_call.1} parent=5 // pred_check
        _
      $region10: #{tpu_custom_call.1} parent=5 // pred_check_branch
        %163 = sbr.rel (%p160) target = $region12
      $region11: #{tpu_custom_call.1} parent=5 // pred_region
        %s164 = ssub.s32 %s14, 1
        // Predicated region
        $region13: #{tpu_custom_call.1} parent=11 // pred_check
          %p165 = pneg %p61
        $region14: #{tpu_custom_call.1} parent=11 // pred_check_branch
          %167 = sbr.rel (%p165) target = $region16
        $region15: #{tpu_custom_call.1} parent=11 // pred_region
          _
        $region16: #{tpu_custom_call.1} parent=11 // pred_fallthru
          _
        // Predicated region
        $region17: #{tpu_custom_call.1} parent=11 // pred_check
          %p168 = pneg %p82
        $region18: #{tpu_custom_call.1} parent=11 // pred_check_branch
          %170 = sbr.rel (%p168) target = $region20
        $region19: #{tpu_custom_call.1} parent=11 // pred_region
          _
        $region20: #{tpu_custom_call.1} parent=11 // pred_fallthru
          _
        // Predicated region
        $region21: #{tpu_custom_call.1} parent=11 // pred_check
          %p171 = pneg %p103
        $region22: #{tpu_custom_call.1} parent=11 // pred_check_branch
          %173 = sbr.rel (%p171) target = $region24
        $region23: #{tpu_custom_call.1} parent=11 // pred_region
          _
        $region24: #{tpu_custom_call.1} parent=11 // pred_fallthru
          _
        // Predicated region
        $region25: #{tpu_custom_call.1} parent=11 // pred_check
          %p174 = pneg %p124
        $region26: #{tpu_custom_call.1} parent=11 // pred_check_branch
          %176 = sbr.rel (%p174) target = $region28
        $region27: #{tpu_custom_call.1} parent=11 // pred_region
          _
        $region28: #{tpu_custom_call.1} parent=11 // pred_fallthru
          _
      $region12: #{tpu_custom_call.1} parent=5 // pred_fallthru
        _
      %p177 = scmp.lt.s32.totalorder %s14, 2
      // Predicated region
      $region29: #{tpu_custom_call.1} parent=5 // pred_check
        %p178 = pneg %p177
      $region30: #{tpu_custom_call.1} parent=5 // pred_check_branch
        %180 = sbr.rel (%p178) target = $region32
      $region31: #{tpu_custom_call.1} parent=5 // pred_region
        // Predicated region
        $region33: #{tpu_custom_call.1} parent=31 // pred_check
          %p181 = pneg %p34
        $region34: #{tpu_custom_call.1} parent=31 // pred_check_branch
          %183 = sbr.rel (%p181) target = $region36
        $region35: #{tpu_custom_call.1} parent=31 // pred_region
          %s184 = smul.u32 2, %s14
          %s185 = ssub.s32 3, %s184
          %p186 = scmp.lt.s32.totalorder %s185, 2
          %s187 = scalar_select %p186, %s185, 2
          %s188 = smul.u32 8, %s187
          %p189 = scmp.lt.s32.totalorder %s184, 2
          %s190 = scalar_select %p189, %s184, 2
          %s191 = smul.addr %s190, 8
          %s192 = scalar_lea.vmem %s0, %s191
          %s193 = smul.u32 2, %s14
          %s194 = ssub.s32 3, %s193
          %p195 = scmp.lt.s32.totalorder %s194, 2
          %s196 = scalar_select %p195, %s194, 2
          %s197 = smul.u32 8, %s196
        $region36: #{tpu_custom_call.1} parent=31 // pred_fallthru
          _
      $region32: #{tpu_custom_call.1} parent=5 // pred_fallthru
        _
      %p198 = scmp.le.s32.totalorder 1, %s14
      %p199 = scmp.lt.s32.totalorder %s14, 3
      %p200 = pnand %p198, %p199
      %p201 = pneg %p200
      // Predicated region
      $region37: #{tpu_custom_call.1} parent=5 // pred_check
        _
      $region38: #{tpu_custom_call.1} parent=5 // pred_check_branch
        %203 = sbr.rel (%p200) target = $region40
      $region39: #{tpu_custom_call.1} parent=5 // pred_region
        %s204 = ssub.s32 %s14, 1
        %s205 = smul.u32 2, %s19
        %s206 = ssub.s32 3, %s205
        %p207 = scmp.lt.s32.totalorder %s206, 2
        %s208 = scalar_select %p207, %s206, 2
        %s209 = smul.u32 8, %s208
        %p210 = scmp.lt.s32.totalorder %s205, 2
        %s211 = scalar_select %p210, %s205, 2
        %s212 = smul.addr %s211, 8
        %s213 = scalar_lea.vmem %s0, %s212
        %p214 = pneg %p40
        %p215 = pneg %p37
        %p216 = pneg %p61
        %p217 = pneg %p58
        %p218 = pneg %p82
        %p219 = pneg %p79
        %p220 = pneg %p103
        %p221 = pneg %p100
        %p222 = pneg %p124
        %p223 = pneg %p121
        %p224 = pneg %p150
        %p225 = pneg %p147
        %s226 = sand.u32 %s137, 1
        %s227 = scalar_lea.sflag [#allocation3], %s226
        %s228 = sand.u32 %s137, 1
        %s229 = smul.addr %s228, 16
        %s230 = scalar_lea.vmem [#allocation2], %s229
        %s231 = smul.u32 2, %s19
        %s232 = ssub.s32 3, %s231
        %p233 = scmp.lt.s32.totalorder %s232, 2
        %s234 = scalar_select %p233, %s232, 2
        %s235 = smul.u32 8, %s234
        %p236 = scmp.lt.s32.totalorder %s231, 2
        %s237 = scalar_select %p236, %s231, 2
        %s238 = smul.addr %s237, 8
        %s239 = scalar_lea.vmem %s0, %s238
        %s240 = smul.u32 2, %s19
        %s241 = ssub.s32 3, %s240
        %p242 = scmp.lt.s32.totalorder %s241, 2
        %s243 = scalar_select %p242, %s241, 2
        %s244 = smul.u32 8, %s243
        %s245 = smul.u32 2, %s19
        %s246 = ssub.s32 3, %s245
        %p247 = scmp.lt.s32.totalorder %s246, 2
        %s248 = scalar_select %p247, %s246, 2
        %s249 = smul.u32 8, %s248
        %v250 = vld [vmem:[%s239] sm:$0xff]
        %v251 = vld [vmem:[%s239 + $0x8] sm:$0xff]
        %v252 = vld [vmem:[%s1] sm:$0xff]
        %v253 = vld [vmem:[%s1 + $0x8] sm:$0xff]
        %v254 = vld [vmem:[%s1 + $0x10] sm:$0xff]
        %v255 = vld [vmem:[%s1 + $0x18] sm:$0xff]
        %v256 = vld [vmem:[%s1 + $0x20] sm:$0xff]
        %v257 = vld [vmem:[%s1 + $0x28] sm:$0xff]
        %v258 = vld [vmem:[%s1 + $0x30] sm:$0xff]
        %v259 = vld [vmem:[%s1 + $0x38] sm:$0xff]
        %v260 = vld [vmem:[%s2] sm:$0x1]
        %v262 = vperm.slane %v260, 0
        %vm264 = vcmask 523264
        %v266 = vsel %vm264, %v250, 0
        %v269 = vsel %vm264, %v251, 0
        %271 = vmatpush.msra.mxu0 0.0
        %272 = vmatpush.msra.mxu0 0.0
        %273 = vmatpush.msra.mxu0 0.0
        %274 = vmatpush.msra.mxu0 0.0
        %275 = vmatpush.msra.mxu0 0.0
        %276 = vmatpush.msra.mxu0 0.0
        %277 = vmatpush.msra.mxu0 0.0
        %278 = vmatpush.msra.mxu0 0.0
        %279 = vmatpush.msra.mxu0 %v259
        %280 = vmatpush.msra.mxu0 %v258
        %281 = vmatpush.msra.mxu0 %v257
        %282 = vmatpush.msra.mxu0 %v256
        %283 = vmatpush.msra.mxu0 %v255
        %284 = vmatpush.msra.mxu0 %v254
        %285 = vmatpush.msra.mxu0 %v253
        %286 = vmatpush.msra.mxu0 %v252
        %287 = vmatmul.f32.gmra.mxu0 %v266
        %v288 = vpop.f32.mrf.mxu0
        %v289 = vadd.f32 %v262, %v288
        %290 = vmatmul.f32.gmra.mxu0 %v269
        %v291 = vpop.f32.mrf.mxu0
        %v292 = vadd.f32 %v262, %v291
        %293 = vdwg.mxu0
        %v294 = vmax.f32 %v289, 0.0
        %v295 = vmax.f32 %v292, 0.0
        %v296 = vld [vmem:[%s3] sm:$0xff]
        %v297 = vld [vmem:[%s3 + $0x8] sm:$0xff]
        %v298 = vld [vmem:[%s3 + $0x10] sm:$0xff]
        %v299 = vld [vmem:[%s3 + $0x18] sm:$0xff]
        %v300 = vld [vmem:[%s3 + $0x20] sm:$0xff]
        %v301 = vld [vmem:[%s3 + $0x28] sm:$0xff]
        %v302 = vld [vmem:[%s3 + $0x30] sm:$0xff]
        %v303 = vld [vmem:[%s3 + $0x38] sm:$0xff]
        %v304 = vld [vmem:[%s3 + $0x40] sm:$0xff]
        %v305 = vld [vmem:[%s3 + $0x48] sm:$0xff]
        %v306 = vld [vmem:[%s3 + $0x50] sm:$0xff]
        %v307 = vld [vmem:[%s3 + $0x58] sm:$0xff]
        %v308 = vld [vmem:[%s3 + $0x60] sm:$0xff]
        %v309 = vld [vmem:[%s3 + $0x68] sm:$0xff]
        %v310 = vld [vmem:[%s3 + $0x70] sm:$0xff]
        %v311 = vld [vmem:[%s3 + $0x78] sm:$0xff]
        %v312 = vld [vmem:[%s4] sm:$0x1]
        %v314 = vperm.slane %v312, 0
        %316 = vmatpush.msra.mxu0 %v311
        %317 = vmatpush.msra.mxu0 %v310
        %318 = vmatpush.msra.mxu0 %v309
        %319 = vmatpush.msra.mxu0 %v308
        %320 = vmatpush.msra.mxu0 %v307
        %321 = vmatpush.msra.mxu0 %v306
        %322 = vmatpush.msra.mxu0 %v305
        %323 = vmatpush.msra.mxu0 %v304
        %324 = vmatpush.msra.mxu0 %v303
        %325 = vmatpush.msra.mxu0 %v302
        %326 = vmatpush.msra.mxu0 %v301
        %327 = vmatpush.msra.mxu0 %v300
        %328 = vmatpush.msra.mxu0 %v299
        %329 = vmatpush.msra.mxu0 %v298
        %330 = vmatpush.msra.mxu0 %v297
        %331 = vmatpush.msra.mxu0 %v296
        %332 = vmatmul.f32.gmra.mxu0 %v294
        %v333 = vpop.f32.mrf.mxu0
        %v334 = vadd.f32 %v314, %v333
        %335 = vmatmul.f32.gmra.mxu0 %v295
        %v336 = vpop.f32.mrf.mxu0
        %v337 = vadd.f32 %v314, %v336
        %338 = vdwg.mxu0
        %v339 = vmax.f32 %v334, 0.0
        %v340 = vmax.f32 %v337, 0.0
        %341 = vst.msk [vmem:[%s230] sm:$0xff] %vm264, %v339
        %342 = vst.msk [vmem:[%s230 + $0x8] sm:$0xff] %vm264, %v340
        %s343 = sand.u32 %s137, 1
        %s344 = scalar_lea.sflag [#allocation3], %s343
        %s345 = sand.u32 %s137, 1
        %s346 = smul.addr %s345, 16
        %s347 = scalar_lea.vmem [#allocation2], %s346
        // Predicated region
        $region41: #{tpu_custom_call.1} parent=39 // pred_check
          %p348 = pneg %p147
        $region42: #{tpu_custom_call.1} parent=39 // pred_check_branch
          %350 = sbr.rel (%p348) target = $region44
        $region43: #{tpu_custom_call.1} parent=39 // pred_region
          %s351 = smul.u32 2, %s19
          %s352 = ssub.s32 3, %s351
          %p353 = scmp.lt.s32.totalorder %s352, 2
          %s354 = scalar_select %p353, %s352, 2
          %s355 = smul.u32 8, %s354
          %s356 = ssub.s32 16, %s355
          %s357 = sshll.u32 %s356, 4
          %358 = vsyncadd %s344, %s357
          %p359 = scmp.ne.s32.totalorder 0, %s355
          %s360 = smul.addr %s351, 8
          %s361 = scalar_lea.hbm %s5, %s360
          %s362 = smul.u32 8, %s354
          %s363 = sshll.u32 %s347, 4
          %s364 = int_to_ptr.vmem [resolvable:$true] %s363
          %s365 = sshll.u32 %s361, 4
          %s366 = int_to_ptr.hbm [resolvable:$true] %s365
          %s367 = sshll.u32 %s362, 4
          %371 = dma.vmem_to_hbm [thread:$0]  (%p359), %s364, %s367, %s366, %s344, 128, 128, 8
        $region44: #{tpu_custom_call.1} parent=39 // pred_fallthru
          _
      $region40: #{tpu_custom_call.1} parent=5 // pred_fallthru
        _
      %p372 = scmp.le.s32.totalorder 2, %s14
      // Predicated region
      $region45: #{tpu_custom_call.1} parent=5 // pred_check
        %p373 = pneg %p372
      $region46: #{tpu_custom_call.1} parent=5 // pred_check_branch
        %375 = sbr.rel (%p373) target = $region48
      $region47: #{tpu_custom_call.1} parent=5 // pred_region
        %s376 = ssub.s32 %s14, 2
        // Predicated region
        $region49: #{tpu_custom_call.1} parent=47 // pred_check
          %p377 = pneg %p153
        $region50: #{tpu_custom_call.1} parent=47 // pred_check_branch
          %379 = sbr.rel (%p377) target = $region52
        $region51: #{tpu_custom_call.1} parent=47 // pred_region
          %s380 = sand.u32 %s138, 1
          %s381 = scalar_lea.sflag [#allocation3], %s380
          %s382 = sand.u32 %s138, 1
          %s383 = smul.addr %s382, 16
          %s384 = scalar_lea.vmem [#allocation2], %s383
          %386 = dma.done %s381, 256
        $region52: #{tpu_custom_call.1} parent=47 // pred_fallthru
          _
      $region48: #{tpu_custom_call.1} parent=5 // pred_fallthru
        _
    $region6: #{tpu_custom_call.1} parent=1 // loop_footer
      %s18 = sadd.s32 1, %s14
    $region7: #{tpu_custom_call.1} parent=1 // loop_footer_branch
      %13 = sbr.rel target = $region3
    $region8: #{tpu_custom_call.1} parent=1 // loop_exit
      _
    %387 = vsyncpa [#allocation3], 1
    %s388 = scalar_lea.sflag [#allocation3], 1
    %389 = vsyncpa %s388, 1

</llo_original>
